<compile_context>
chip_gen: v7x
topology: tpu7x:2x2x1
jax: 0.10.0
libtpu: 0.0.40
codegen_flags: <defaults>
</compile_context>

<pallas_src>
import jax
import jax.numpy as jnp
from jax.experimental import pallas as pl
from jax.experimental.pallas import tpu as pltpu

FEATURES = 32
HIDDEN = 100          # logical hidden size (torch module); padded to 128 internally
N_OUTPUT = 1
BATCH = 200           # deliberately not a multiple of the tile -> exercises padding
BLOCK_B = 128         # batch rows per grid step


def _mlp_kernel_o1(x_ref, w1_ref, b1_ref, w2t_ref, b2_ref, o_ref):
    # hidden = relu(x @ W1 + b1)  -- MXU matmul, f32 accumulate, VPU bias/ReLU
    h = jnp.dot(x_ref[...], w1_ref[...], preferred_element_type=jnp.float32)
    h = jnp.maximum(h + b1_ref[...], 0.0)
    # n_output == 1: second layer as a lane reduction (VPU mul + XLU reduce)
    # instead of a 1-column MXU matmul.  w2t is W2 transposed to [1, Hp].
    o = jnp.sum(h * w2t_ref[...], axis=-1, keepdims=True)
    o_ref[...] = o + b2_ref[...]


def _mlp_kernel_generic(x_ref, w1_ref, b1_ref, w2_ref, b2_ref, o_ref):
    # general n_output path: keep the second matmul on the MXU.
    h = jnp.dot(x_ref[...], w1_ref[...], preferred_element_type=jnp.float32)
    h = jnp.maximum(h + b1_ref[...], 0.0)
    o = jnp.dot(h, w2_ref[...], preferred_element_type=jnp.float32)
    o_ref[...] = o + b2_ref[...]


def net_forward(x, w1, b1, w2, b2, *, block_b=BLOCK_B):
    """x:[B,F] f32, w1:[F,H], b1:[1,H], w2:[H,O], b2:[1,O] -> [B,O] f32."""
    B, F = x.shape
    H = w1.shape[1]
    O = w2.shape[1]

    # ---- pad hidden dim to the 128-lane boundary (zero padding => identical math)
    Hp = pl.cdiv(H, 128) * 128
    if Hp != H:
        w1 = jnp.pad(w1, ((0, 0), (0, Hp - H)))
        b1 = jnp.pad(b1, ((0, 0), (0, Hp - H)))
        w2 = jnp.pad(w2, ((0, Hp - H), (0, 0)))

    # ---- pick a batch tile and pad the batch so the grid is exact
    if B >= block_b:
        TB = block_b
    else:
        TB = max(8, pl.cdiv(B, 8) * 8)        # keep sublane (x8) alignment
    Bp = pl.cdiv(B, TB) * TB
    if Bp != B:
        x = jnp.pad(x, ((0, Bp - B), (0, 0)))
    grid = (Bp // TB,)

    # ---- advisory cost estimate (logical, unpadded work)
    cost = pl.CostEstimate(
        flops=2 * B * (F * H + H * O),
        transcendentals=0,
        bytes_accessed=4 * (B * F + F * H + H + H * O + O + B * O),
    )
    compiler_params = pltpu.CompilerParams(
        dimension_semantics=("parallel",),    # shards the batch grid on v7x's 2 TCs
    )

    weight_spec = lambda shape: pl.BlockSpec(shape, lambda i: (0, 0))  # resident
    x_spec = pl.BlockSpec((TB, F), lambda i: (i, 0))
    o_spec = pl.BlockSpec((TB, O), lambda i: (i, 0))

    if O == 1:
        kernel = _mlp_kernel_o1
        w2_arg = w2.T                          # [1, Hp] lane-dense row
        w2_spec = weight_spec((1, Hp))
    else:
        kernel = _mlp_kernel_generic
        w2_arg = w2
        w2_spec = weight_spec((Hp, O))

    out = pl.pallas_call(
        kernel,
        out_shape=jax.ShapeDtypeStruct((Bp, O), jnp.float32),
        grid=grid,
        in_specs=[
            x_spec,
            weight_spec((F, Hp)),
            weight_spec((1, Hp)),
            w2_spec,
            weight_spec((1, O)),
        ],
        out_specs=o_spec,
        compiler_params=compiler_params,
        cost_estimate=cost,
    )(x, w1, b1, w2_arg, b2)

    return out[:B]


def init_params(key):
    # Deterministic init mimicking torch.nn.Linear's uniform(-1/sqrt(fan_in), +)
    k1, k2, k3, k4 = jax.random.split(key, 4)
    bound1 = 1.0 / jnp.sqrt(FEATURES)
    bound2 = 1.0 / jnp.sqrt(HIDDEN)
    w1 = jax.random.uniform(k1, (FEATURES, HIDDEN), jnp.float32, -bound1, bound1)
    b1 = jax.random.uniform(k2, (1, HIDDEN), jnp.float32, -bound1, bound1)
    w2 = jax.random.uniform(k3, (HIDDEN, N_OUTPUT), jnp.float32, -bound2, bound2)
    b2 = jax.random.uniform(k4, (1, N_OUTPUT), jnp.float32, -bound2, bound2)
    return w1, b1, w2, b2


if __name__ == "__main__":
    key = jax.random.PRNGKey(0)
    kx, kp = jax.random.split(key)
    x = jax.random.normal(kx, (BATCH, FEATURES), jnp.float32)
    w1, b1, w2, b2 = init_params(kp)

    out = net_forward(x, w1, b1, w2, b2)
    out = jax.block_until_ready(out)

    # Pure-JAX reference (f32-exact matmuls) on the *unpadded* weights.
    h_ref = jnp.maximum(
        jnp.dot(x, w1, precision=jax.lax.Precision.HIGHEST) + b1, 0.0)
    ref = jnp.dot(h_ref, w2, precision=jax.lax.Precision.HIGHEST) + b2

    assert out.shape == (BATCH, N_OUTPUT)
    assert jnp.allclose(out, ref, atol=1e-4, rtol=1e-5)

    print("KERNEL_OK")
</pallas_src>

<mosaic_0001>
module attributes {stable_mosaic.version = 11 : i64} {
  func.func @_mlp_kernel_o1(%arg0: i32, %arg1: memref<128x32xf32, #tpu.memory_space<vmem>>, %arg2: memref<32x128xf32, #tpu.memory_space<vmem>>, %arg3: memref<1x128xf32, #tpu.memory_space<vmem>>, %arg4: memref<1x128xf32, #tpu.memory_space<vmem>>, %arg5: memref<1x1xf32, #tpu.memory_space<vmem>>, %arg6: memref<128x1xf32, #tpu.memory_space<vmem>>) attributes {dimension_semantics = [#tpu.dimension_semantics<parallel>], iteration_bounds = array<i64: 2>, scalar_prefetch = 0 : i64, scratch_operands = 0 : i64, tpu.core_type = #tpu.core_type<tc>, window_params = [{transform_indices = @transform_0, window_bounds = array<i64: 128, 32>}, {pipeline_mode = #tpu.pipeline_mode<synchronous>, transform_indices = @transform_1, window_bounds = array<i64: 32, 128>}, {pipeline_mode = #tpu.pipeline_mode<synchronous>, transform_indices = @transform_2, window_bounds = array<i64: 1, 128>}, {pipeline_mode = #tpu.pipeline_mode<synchronous>, transform_indices = @transform_3, window_bounds = array<i64: 1, 128>}, {pipeline_mode = #tpu.pipeline_mode<synchronous>, transform_indices = @transform_4, window_bounds = array<i64: 1, 1>}, {transform_indices = @transform_5, window_bounds = array<i64: 128, 1>}]} {
    %c0 = arith.constant 0 : index
    %c0_0 = arith.constant 0 : index
    %0 = vector.load %arg1[%c0, %c0_0] : memref<128x32xf32, #tpu.memory_space<vmem>>, vector<128x32xf32>
    %c0_1 = arith.constant 0 : index
    %c0_2 = arith.constant 0 : index
    %1 = vector.load %arg2[%c0_1, %c0_2] : memref<32x128xf32, #tpu.memory_space<vmem>>, vector<32x128xf32>
    %cst = arith.constant dense<0.000000e+00> : vector<128x128xf32>
    %2 = tpu.matmul %0, %1, %cst {dimension_numbers = #tpu.dot_dimension_numbers<[1], [0], [0], [1], [0, 0, 1, 1], [], []>} : vector<128x32xf32>, vector<32x128xf32>, vector<128x128xf32> -> vector<128x128xf32>
    %c0_3 = arith.constant 0 : index
    %c0_4 = arith.constant 0 : index
    %3 = vector.load %arg3[%c0_3, %c0_4] : memref<1x128xf32, #tpu.memory_space<vmem>>, vector<1x128xf32>
    %4 = vector.broadcast %3 : vector<1x128xf32> to vector<128x128xf32>
    %5 = arith.addf %2, %4 : vector<128x128xf32>
    %cst_5 = arith.constant 0.000000e+00 : f32
    %6 = vector.broadcast %cst_5 : f32 to vector<128x128xf32>
    %7 = arith.maximumf %5, %6 : vector<128x128xf32>
    %c0_6 = arith.constant 0 : index
    %c0_7 = arith.constant 0 : index
    %8 = vector.load %arg4[%c0_6, %c0_7] : memref<1x128xf32, #tpu.memory_space<vmem>>, vector<1x128xf32>
    %9 = vector.broadcast %8 : vector<1x128xf32> to vector<128x128xf32>
    %10 = arith.mulf %7, %9 : vector<128x128xf32>
    %cst_8 = arith.constant dense<0.000000e+00> : vector<128xf32>
    %11 = vector.multi_reduction <add>, %10, %cst_8 [1] : vector<128x128xf32> to vector<128xf32>
    %12 = vector.shape_cast %11 : vector<128xf32> to vector<128x1xf32>
    %c0_9 = arith.constant 0 : index
    %c0_10 = arith.constant 0 : index
    %13 = vector.load %arg5[%c0_9, %c0_10] : memref<1x1xf32, #tpu.memory_space<vmem>>, vector<1x1xf32>
    %14 = vector.broadcast %13 : vector<1x1xf32> to vector<128x1xf32>
    %15 = arith.addf %12, %14 : vector<128x1xf32>
    %c0_11 = arith.constant 0 : index
    %c0_12 = arith.constant 0 : index
    %16 = vector.load %arg6[%c0_11, %c0_12] : memref<128x1xf32, #tpu.memory_space<vmem>>, vector<128x1xf32>
    tpu.vector_store %arg6[%c0_11, %c0_12], %15 {strides = array<i32>} : memref<128x1xf32, #tpu.memory_space<vmem>>, vector<128x1xf32>,
    return
  }
  func.func @transform_0(%arg0: i32) -> (i32, i32) {
    %c0_i32 = arith.constant 0 : i32
    %c0_i32_0 = arith.constant 0 : i32
    return %arg0, %c0_i32 : i32, i32
  }
  func.func @transform_1(%arg0: i32) -> (i32, i32) {
    %c0_i32 = arith.constant 0 : i32
    %c0_i32_0 = arith.constant 0 : i32
    %c0_i32_1 = arith.constant 0 : i32
    return %c0_i32, %c0_i32_0 : i32, i32
  }
  func.func @transform_2(%arg0: i32) -> (i32, i32) {
    %c0_i32 = arith.constant 0 : i32
    %c0_i32_0 = arith.constant 0 : i32
    %c0_i32_1 = arith.constant 0 : i32
    return %c0_i32, %c0_i32_0 : i32, i32
  }
  func.func @transform_3(%arg0: i32) -> (i32, i32) {
    %c0_i32 = arith.constant 0 : i32
    %c0_i32_0 = arith.constant 0 : i32
    %c0_i32_1 = arith.constant 0 : i32
    return %c0_i32, %c0_i32_0 : i32, i32
  }
  func.func @transform_4(%arg0: i32) -> (i32, i32) {
    %c0_i32 = arith.constant 0 : i32
    %c0_i32_0 = arith.constant 0 : i32
    %c0_i32_1 = arith.constant 0 : i32
    return %c0_i32, %c0_i32_0 : i32, i32
  }
  func.func @transform_5(%arg0: i32) -> (i32, i32) {
    %c0_i32 = arith.constant 0 : i32
    %c0_i32_0 = arith.constant 0 : i32
    return %arg0, %c0_i32 : i32, i32
  }
}

</mosaic_0001>

<llo_original>
// kernel: tpu_custom_call.1
$region0: #{tpu_custom_call.1}
  #allocation0 [shape = 'u32[]', space=smem, size = 0x4, offset = 0x4, fixed_abs, tag = 'smem constant byte address 0x4 - core index']
  #allocation1 [shape = 'u32[144,128]{1,0:T(1,128)}', space=vmem, size = 0x12000, scoped, tag = 'internal scratch']
  #allocation2 [shape = 'f32[1,1]{1,0:T(1,128)S(1)}', space=vmem, size = 0x200, scoped, tag = 'scoped memory for tpu_custom_call.1']
  %s0 = inlined_call_operand.vmem [shape: f32[256,32], index: 0, kind: input, shape index: {}]
  %s1 = inlined_call_operand.vmem [shape: f32[32,128], index: 1, kind: input, shape index: {}]
  %s2 = inlined_call_operand.vmem [shape: f32[1,128], index: 2, kind: input, shape index: {}]
  %s3 = inlined_call_operand.vmem [shape: f32[1,128], index: 3, kind: input, shape index: {}]
  %s4 = inlined_call_operand.<no memory space> [shape: f32[1,1], index: 4, kind: input, shape index: {}]
  %s5 = inlined_call_operand.vmem [shape: f32[256,1], index: 5, kind: output, shape index: {}]
  %s6 = sld [smem:[#allocation0]]
  $region53: #{tpu_custom_call.1} parent=0
    _
  %s8 = ssub.s32 1, %s6
  %s9 = scalar_select 0, %s8, %s6
  %v10 = vstv %s4
  %11 = vst [vmem:[#allocation2] sm:$0x1] %v10
  loop: start=0, step=1, limit=4
  $region2: #{tpu_custom_call.1} parent=0 // loop_pre_header
    _
  $region3: #{tpu_custom_call.1} parent=0 // loop_header
    %s13 = sphi 0, %s17
    %p14 = scmp.ge.s32.totalorder %s13, 4
    %s23 = sphi 0, %s25
    %s26 = sphi 0, %s23
    %s27 = sphi 0, %s26
    %s43 = sphi 0, %s27
    %s47 = sphi 0, %s47
    %s49 = sphi 0, %s47
    %s50 = sphi 0, %s49
    %s64 = sphi 0, %s50
    %s68 = sphi 0, %s68
    %s70 = sphi 0, %s68
    %s71 = sphi 0, %s70
    %s85 = sphi 0, %s71
    %s89 = sphi 0, %s89
    %s91 = sphi 0, %s89
    %s92 = sphi 0, %s91
    %s106 = sphi 0, %s92
    %s110 = sphi 0, %s110
    %s112 = sphi 0, %s110
    %s113 = sphi 0, %s112
    %s127 = sphi 0, %s113
    %s133 = sphi 0, %s135
    %s136 = sphi 0, %s133
    %s137 = sphi 0, %s136
    %s153 = sphi 0, %s137
  $region4: #{tpu_custom_call.1} parent=0 // loop_header_branch
    %16 = sbr.rel (%p14) target = $region8
  $region5: #{tpu_custom_call.1} parent=0 // loop_body
    %s18 = ssub.s32 %s13, 1
    %s19 = ssub.s32 %s13, 2
    %s20 = sadd.s32 %s13, 1
    %s21 = ssub.s32 %s13, %s20
    %p22 = scmp.eq.s32.totalorder %s21, 0
    %s24 = sadd.s32 %s23, 1
    %s25 = scalar_select %p22, %s23, %s24
    %p28 = pneg %p22
    %p29 = scmp.eq.s32.totalorder %s13, 1
    %p30 = por %p28, %p29
    %p31 = scmp.ne.s32.totalorder %s23, %s26
    %p32 = scmp.eq.s32.totalorder %s13, 0
    %p33 = por %p31, %p32
    %p34 = scmp.ne.s32.totalorder %s23, %s26
    %p35 = scmp.eq.s32.totalorder %s18, 1
    %p36 = por %p34, %p35
    %p37 = scmp.ne.s32.totalorder %s26, %s27
    %p38 = scmp.eq.s32.totalorder %s18, 0
    %p39 = por %p37, %p38
    %p40 = scmp.ne.s32.totalorder %s26, %s27
    %p41 = scmp.eq.s32.totalorder %s19, 1
    %p42 = por %p40, %p41
    %p44 = scmp.ne.s32.totalorder %s27, %s43
    %p45 = scmp.eq.s32.totalorder %s19, 0
    %p46 = por %p44, %p45
    %s48 = sadd.s32 %s47, 1
    %p51 = scmp.eq.s32.totalorder %s13, 1
    %p52 = scmp.ne.s32.totalorder %s47, %s49
    %p53 = scmp.eq.s32.totalorder %s13, 0
    %p54 = por %p52, %p53
    %p55 = scmp.ne.s32.totalorder %s47, %s49
    %p56 = scmp.eq.s32.totalorder %s18, 1
    %p57 = por %p55, %p56
    %p58 = scmp.ne.s32.totalorder %s49, %s50
    %p59 = scmp.eq.s32.totalorder %s18, 0
    %p60 = por %p58, %p59
    %p61 = scmp.ne.s32.totalorder %s49, %s50
    %p62 = scmp.eq.s32.totalorder %s19, 1
    %p63 = por %p61, %p62
    %p65 = scmp.ne.s32.totalorder %s50, %s64
    %p66 = scmp.eq.s32.totalorder %s19, 0
    %p67 = por %p65, %p66
    %s69 = sadd.s32 %s68, 1
    %p72 = scmp.eq.s32.totalorder %s13, 1
    %p73 = scmp.ne.s32.totalorder %s68, %s70
    %p74 = scmp.eq.s32.totalorder %s13, 0
    %p75 = por %p73, %p74
    %p76 = scmp.ne.s32.totalorder %s68, %s70
    %p77 = scmp.eq.s32.totalorder %s18, 1
    %p78 = por %p76, %p77
    %p79 = scmp.ne.s32.totalorder %s70, %s71
    %p80 = scmp.eq.s32.totalorder %s18, 0
    %p81 = por %p79, %p80
    %p82 = scmp.ne.s32.totalorder %s70, %s71
    %p83 = scmp.eq.s32.totalorder %s19, 1
    %p84 = por %p82, %p83
    %p86 = scmp.ne.s32.totalorder %s71, %s85
    %p87 = scmp.eq.s32.totalorder %s19, 0
    %p88 = por %p86, %p87
    %s90 = sadd.s32 %s89, 1
    %p93 = scmp.eq.s32.totalorder %s13, 1
    %p94 = scmp.ne.s32.totalorder %s89, %s91
    %p95 = scmp.eq.s32.totalorder %s13, 0
    %p96 = por %p94, %p95
    %p97 = scmp.ne.s32.totalorder %s89, %s91
    %p98 = scmp.eq.s32.totalorder %s18, 1
    %p99 = por %p97, %p98
    %p100 = scmp.ne.s32.totalorder %s91, %s92
    %p101 = scmp.eq.s32.totalorder %s18, 0
    %p102 = por %p100, %p101
    %p103 = scmp.ne.s32.totalorder %s91, %s92
    %p104 = scmp.eq.s32.totalorder %s19, 1
    %p105 = por %p103, %p104
    %p107 = scmp.ne.s32.totalorder %s92, %s106
    %p108 = scmp.eq.s32.totalorder %s19, 0
    %p109 = por %p107, %p108
    %s111 = sadd.s32 %s110, 1
    %p114 = scmp.eq.s32.totalorder %s13, 1
    %p115 = scmp.ne.s32.totalorder %s110, %s112
    %p116 = scmp.eq.s32.totalorder %s13, 0
    %p117 = por %p115, %p116
    %p118 = scmp.ne.s32.totalorder %s110, %s112
    %p119 = scmp.eq.s32.totalorder %s18, 1
    %p120 = por %p118, %p119
    %p121 = scmp.ne.s32.totalorder %s112, %s113
    %p122 = scmp.eq.s32.totalorder %s18, 0
    %p123 = por %p121, %p122
    %p124 = scmp.ne.s32.totalorder %s112, %s113
    %p125 = scmp.eq.s32.totalorder %s19, 1
    %p126 = por %p124, %p125
    %p128 = scmp.ne.s32.totalorder %s113, %s127
    %p129 = scmp.eq.s32.totalorder %s19, 0
    %p130 = por %p128, %p129
    %s131 = ssub.s32 %s13, %s20
    %p132 = scmp.eq.s32.totalorder %s131, 0
    %s134 = sadd.s32 %s133, 1
    %s135 = scalar_select %p132, %s133, %s134
    %p138 = pneg %p132
    %p139 = scmp.eq.s32.totalorder %s13, 1
    %p140 = por %p138, %p139
    %p141 = scmp.ne.s32.totalorder %s133, %s136
    %p142 = scmp.eq.s32.totalorder %s13, 0
    %p143 = por %p141, %p142
    %p144 = scmp.ne.s32.totalorder %s133, %s136
    %p145 = scmp.eq.s32.totalorder %s18, 1
    %p146 = por %p144, %p145
    %p147 = scmp.ne.s32.totalorder %s136, %s137
    %p148 = scmp.eq.s32.totalorder %s18, 0
    %p149 = por %p147, %p148
    %p150 = scmp.ne.s32.totalorder %s136, %s137
    %p151 = scmp.eq.s32.totalorder %s19, 1
    %p152 = por %p150, %p151
    %p154 = scmp.ne.s32.totalorder %s137, %s153
    %p155 = scmp.eq.s32.totalorder %s19, 0
    %p156 = por %p154, %p155
    %p157 = scmp.le.s32.totalorder 1, %s13
    %p158 = scmp.lt.s32.totalorder %s13, 3
    %p159 = pnand %p157, %p158
    %p160 = pneg %p159
    // Predicated region
    $region9: #{tpu_custom_call.1} parent=5 // pred_check
      _
    $region10: #{tpu_custom_call.1} parent=5 // pred_check_branch
      %162 = sbr.rel (%p159) target = $region12
    $region11: #{tpu_custom_call.1} parent=5 // pred_region
      %s163 = ssub.s32 %s13, 1
      // Predicated region
      $region13: #{tpu_custom_call.1} parent=11 // pred_check
        %p164 = pneg %p60
      $region14: #{tpu_custom_call.1} parent=11 // pred_check_branch
        %166 = sbr.rel (%p164) target = $region16
      $region15: #{tpu_custom_call.1} parent=11 // pred_region
        _
      $region16: #{tpu_custom_call.1} parent=11 // pred_fallthru
        _
      // Predicated region
      $region17: #{tpu_custom_call.1} parent=11 // pred_check
        %p167 = pneg %p81
      $region18: #{tpu_custom_call.1} parent=11 // pred_check_branch
        %169 = sbr.rel (%p167) target = $region20
      $region19: #{tpu_custom_call.1} parent=11 // pred_region
        _
      $region20: #{tpu_custom_call.1} parent=11 // pred_fallthru
        _
      // Predicated region
      $region21: #{tpu_custom_call.1} parent=11 // pred_check
        %p170 = pneg %p102
      $region22: #{tpu_custom_call.1} parent=11 // pred_check_branch
        %172 = sbr.rel (%p170) target = $region24
      $region23: #{tpu_custom_call.1} parent=11 // pred_region
        _
      $region24: #{tpu_custom_call.1} parent=11 // pred_fallthru
        _
      // Predicated region
      $region25: #{tpu_custom_call.1} parent=11 // pred_check
        %p173 = pneg %p123
      $region26: #{tpu_custom_call.1} parent=11 // pred_check_branch
        %175 = sbr.rel (%p173) target = $region28
      $region27: #{tpu_custom_call.1} parent=11 // pred_region
        _
      $region28: #{tpu_custom_call.1} parent=11 // pred_fallthru
        _
    $region12: #{tpu_custom_call.1} parent=5 // pred_fallthru
      _
    %p176 = scmp.lt.s32.totalorder %s13, 2
    // Predicated region
    $region29: #{tpu_custom_call.1} parent=5 // pred_check
      %p177 = pneg %p176
    $region30: #{tpu_custom_call.1} parent=5 // pred_check_branch
      %179 = sbr.rel (%p177) target = $region32
    $region31: #{tpu_custom_call.1} parent=5 // pred_region
      // Predicated region
      $region33: #{tpu_custom_call.1} parent=31 // pred_check
        %p180 = pneg %p33
      $region34: #{tpu_custom_call.1} parent=31 // pred_check_branch
        %182 = sbr.rel (%p180) target = $region36
      $region35: #{tpu_custom_call.1} parent=31 // pred_region
        %s183 = smul.u32 16, %s13
        %p184 = scmp.lt.s32.totalorder %s183, 31
        %s185 = scalar_select %p184, %s183, 31
        %s186 = smul.addr %s185, 8
        %s187 = scalar_lea.vmem %s0, %s186
        %s188 = smul.u32 16, %s13
      $region36: #{tpu_custom_call.1} parent=31 // pred_fallthru
        _
    $region32: #{tpu_custom_call.1} parent=5 // pred_fallthru
      _
    %p189 = scmp.le.s32.totalorder 1, %s13
    %p190 = scmp.lt.s32.totalorder %s13, 3
    %p191 = pnand %p189, %p190
    %p192 = pneg %p191
    // Predicated region
    $region37: #{tpu_custom_call.1} parent=5 // pred_check
      _
    $region38: #{tpu_custom_call.1} parent=5 // pred_check_branch
      %194 = sbr.rel (%p191) target = $region40
    $region39: #{tpu_custom_call.1} parent=5 // pred_region
      %s195 = ssub.s32 %s13, 1
      %s196 = smul.u32 16, %s18
      %p197 = scmp.lt.s32.totalorder %s196, 31
      %s198 = scalar_select %p197, %s196, 31
      %s199 = smul.addr %s198, 8
      %s200 = scalar_lea.vmem %s0, %s199
      %p201 = pneg %p39
      %p202 = pneg %p36
      %p203 = pneg %p60
      %p204 = pneg %p57
      %p205 = pneg %p81
      %p206 = pneg %p78
      %p207 = pneg %p102
      %p208 = pneg %p99
      %p209 = pneg %p123
      %p210 = pneg %p120
      %p211 = pneg %p149
      %p212 = pneg %p146
      %s213 = smul.u32 16, %s18
      %p214 = scmp.lt.s32.totalorder %s213, 31
      %s215 = scalar_select %p214, %s213, 31
      %s216 = smul.addr %s215, 8
      %s217 = scalar_lea.vmem %s5, %s216
      %s218 = smul.u32 16, %s18
      %p219 = scmp.lt.s32.totalorder %s218, 31
      %s220 = scalar_select %p219, %s218, 31
      %s221 = smul.addr %s220, 8
      %s222 = scalar_lea.vmem %s0, %s221
      %s223 = smul.u32 16, %s18
      %s224 = smul.u32 16, %s18
      %p225 = scmp.lt.s32.totalorder %s224, 31
      %s226 = scalar_select %p225, %s224, 31
      %s227 = smul.addr %s226, 8
      %s228 = scalar_lea.vmem %s5, %s227
      %s229 = smul.u32 16, %s18
      %v230 = vld [vmem:[%s222] sm:$0xff]
      %v231 = vld [vmem:[%s222 + $0x8] sm:$0xff]
      %v232 = vld [vmem:[%s222 + $0x10] sm:$0xff]
      %v233 = vld [vmem:[%s222 + $0x18] sm:$0xff]
      %v234 = vld [vmem:[%s222 + $0x20] sm:$0xff]
      %v235 = vld [vmem:[%s222 + $0x28] sm:$0xff]
      %v236 = vld [vmem:[%s222 + $0x30] sm:$0xff]
      %v237 = vld [vmem:[%s222 + $0x38] sm:$0xff]
      %v238 = vld [vmem:[%s222 + $0x40] sm:$0xff]
      %v239 = vld [vmem:[%s222 + $0x48] sm:$0xff]
      %v240 = vld [vmem:[%s222 + $0x50] sm:$0xff]
      %v241 = vld [vmem:[%s222 + $0x58] sm:$0xff]
      %v242 = vld [vmem:[%s222 + $0x60] sm:$0xff]
      %v243 = vld [vmem:[%s222 + $0x68] sm:$0xff]
      %v244 = vld [vmem:[%s222 + $0x70] sm:$0xff]
      %v245 = vld [vmem:[%s222 + $0x78] sm:$0xff]
      %v246 = vld [vmem:[%s1] sm:$0xff]
      %v247 = vld [vmem:[%s1 + $0x8] sm:$0xff]
      %v248 = vld [vmem:[%s1 + $0x10] sm:$0xff]
      %v249 = vld [vmem:[%s1 + $0x18] sm:$0xff]
      %v250 = vld [vmem:[%s2] sm:$0x1]
      %v252 = vlaneseq
      %v253 = vshrl.u32 %v252, 7
      %v254 = vsub.s32 0, %v253
      %v255 = vrot.slane %v250, %v254
      %vm257 = vcmask 261120
      %v259 = vsel %vm257, %v230, 0
      %v262 = vsel %vm257, %v231, 0
      %v265 = vsel %vm257, %v232, 0
      %v268 = vsel %vm257, %v233, 0
      %v271 = vsel %vm257, %v234, 0
      %v274 = vsel %vm257, %v235, 0
      %v277 = vsel %vm257, %v236, 0
      %v280 = vsel %vm257, %v237, 0
      %v283 = vsel %vm257, %v238, 0
      %v286 = vsel %vm257, %v239, 0
      %v289 = vsel %vm257, %v240, 0
      %v292 = vsel %vm257, %v241, 0
      %v295 = vsel %vm257, %v242, 0
      %v298 = vsel %vm257, %v243, 0
      %v301 = vsel %vm257, %v244, 0
      %v304 = vsel %vm257, %v245, 0
      %306 = vmatprep.subr.mxu0 0.0
      %307 = vmatpush1.msra.mxu0 %v246
      %308 = vmatprep.subr.mxu0 0.0
      %309 = vmatpush1.msra.mxu0 %v247
      %310 = vmatprep.subr.mxu0 0.0
      %311 = vmatpush1.msra.mxu0 %v248
      %312 = vmatprep.subr.mxu0 0.0
      %313 = vmatpush1.msra.mxu0 %v249
      %314 = vmatprep.subr.mxu0 0.0
      %315 = vmatpush1.msra.mxu0 0.0
      %316 = vmatprep.subr.mxu0 0.0
      %317 = vmatpush1.msra.mxu0 0.0
      %318 = vmatprep.subr.mxu0 0.0
      %319 = vmatpush1.msra.mxu0 0.0
      %320 = vmatprep.subr.mxu0 0.0
      %321 = vmatpush1.msra.mxu0 0.0
      %322 = vmatprep.subr.mxu0 0.0
      %323 = vmatpush1.msra.mxu0 0.0
      %324 = vmatprep.subr.mxu0 0.0
      %325 = vmatpush1.msra.mxu0 0.0
      %326 = vmatprep.subr.mxu0 0.0
      %327 = vmatpush1.msra.mxu0 0.0
      %328 = vmatprep.subr.mxu0 0.0
      %329 = vmatpush1.msra.mxu0 0.0
      %330 = vmatprep.subr.mxu0 0.0
      %331 = vmatpush1.msra.mxu0 0.0
      %332 = vmatprep.subr.mxu0 0.0
      %333 = vmatpush1.msra.mxu0 0.0
      %334 = vmatprep.subr.mxu0 0.0
      %335 = vmatpush1.msra.mxu0 0.0
      %336 = vmatprep.subr.mxu0 0.0
      %337 = vmatpush1.msra.mxu0 0.0
      %338 = vmatprep.subr.mxu0 0.0
      %339 = vmatpush1.msra.mxu0 0.0
      %340 = vmatprep.subr.mxu0 0.0
      %341 = vmatpush1.msra.mxu0 0.0
      %342 = vmatprep.subr.mxu0 0.0
      %343 = vmatpush1.msra.mxu0 0.0
      %344 = vmatprep.subr.mxu0 0.0
      %345 = vmatpush1.msra.mxu0 0.0
      %346 = vmatprep.subr.mxu0 0.0
      %347 = vmatpush1.msra.mxu0 0.0
      %348 = vmatprep.subr.mxu0 0.0
      %349 = vmatpush1.msra.mxu0 0.0
      %350 = vmatprep.subr.mxu0 0.0
      %351 = vmatpush1.msra.mxu0 0.0
      %352 = vmatprep.subr.mxu0 0.0
      %353 = vmatpush1.msra.mxu0 0.0
      %354 = vmatprep.subr.mxu0 0.0
      %355 = vmatpush1.msra.mxu0 0.0
      %356 = vmatprep.subr.mxu0 0.0
      %357 = vmatpush1.msra.mxu0 0.0
      %358 = vmatprep.subr.mxu0 0.0
      %359 = vmatpush1.msra.mxu0 0.0
      %360 = vmatprep.subr.mxu0 0.0
      %361 = vmatpush1.msra.mxu0 0.0
      %362 = vmatprep.subr.mxu0 0.0
      %363 = vmatpush1.msra.mxu0 0.0
      %364 = vmatprep.subr.mxu0 0.0
      %365 = vmatpush1.msra.mxu0 0.0
      %366 = vmatprep.subr.mxu0 0.0
      %367 = vmatpush1.msra.mxu0 0.0
      %368 = vmatprep.subr.mxu0 0.0
      %369 = vmatpush1.msra.mxu0 0.0
      %370 = vmatprep.mubr.f32.mxu0 0.0
      %371 = vmatmul.mubr.f32.gmra.mrb[0].mxu0 %v259
      %v372 = vpop.f32.mrb[0].mxu0
      %v373 = vadd.f32 %v255, %v372
      %v374 = vpop.f32.mrb[0].mxu0
      %375 = vmatprep.mubr.f32.mxu0 0.0
      %376 = vmatmul.mubr.f32.gmra.mrb[0].mxu0 %v262
      %v377 = vpop.f32.mrb[0].mxu0
      %v378 = vadd.f32 %v255, %v377
      %v379 = vpop.f32.mrb[0].mxu0
      %380 = vmatprep.mubr.f32.mxu0 0.0
      %381 = vmatmul.mubr.f32.gmra.mrb[0].mxu0 %v265
      %v382 = vpop.f32.mrb[0].mxu0
      %v383 = vadd.f32 %v255, %v382
      %v384 = vpop.f32.mrb[0].mxu0
      %385 = vmatprep.mubr.f32.mxu0 0.0
      %386 = vmatmul.mubr.f32.gmra.mrb[0].mxu0 %v268
      %v387 = vpop.f32.mrb[0].mxu0
      %v388 = vadd.f32 %v255, %v387
      %v389 = vpop.f32.mrb[0].mxu0
      %390 = vmatprep.mubr.f32.mxu0 0.0
      %391 = vmatmul.mubr.f32.gmra.mrb[0].mxu0 %v271
      %v392 = vpop.f32.mrb[0].mxu0
      %v393 = vadd.f32 %v255, %v392
      %v394 = vpop.f32.mrb[0].mxu0
      %395 = vmatprep.mubr.f32.mxu0 0.0
      %396 = vmatmul.mubr.f32.gmra.mrb[0].mxu0 %v274
      %v397 = vpop.f32.mrb[0].mxu0
      %v398 = vadd.f32 %v255, %v397
      %v399 = vpop.f32.mrb[0].mxu0
      %400 = vmatprep.mubr.f32.mxu0 0.0
      %401 = vmatmul.mubr.f32.gmra.mrb[0].mxu0 %v277
      %v402 = vpop.f32.mrb[0].mxu0
      %v403 = vadd.f32 %v255, %v402
      %v404 = vpop.f32.mrb[0].mxu0
      %405 = vmatprep.mubr.f32.mxu0 0.0
      %406 = vmatmul.mubr.f32.gmra.mrb[0].mxu0 %v280
      %v407 = vpop.f32.mrb[0].mxu0
      %v408 = vadd.f32 %v255, %v407
      %v409 = vpop.f32.mrb[0].mxu0
      %410 = vmatprep.mubr.f32.mxu0 0.0
      %411 = vmatmul.mubr.f32.gmra.mrb[0].mxu0 %v283
      %v412 = vpop.f32.mrb[0].mxu0
      %v413 = vadd.f32 %v255, %v412
      %v414 = vpop.f32.mrb[0].mxu0
      %415 = vmatprep.mubr.f32.mxu0 0.0
      %416 = vmatmul.mubr.f32.gmra.mrb[0].mxu0 %v286
      %v417 = vpop.f32.mrb[0].mxu0
      %v418 = vadd.f32 %v255, %v417
      %v419 = vpop.f32.mrb[0].mxu0
      %420 = vmatprep.mubr.f32.mxu0 0.0
      %421 = vmatmul.mubr.f32.gmra.mrb[0].mxu0 %v289
      %v422 = vpop.f32.mrb[0].mxu0
      %v423 = vadd.f32 %v255, %v422
      %v424 = vpop.f32.mrb[0].mxu0
      %425 = vmatprep.mubr.f32.mxu0 0.0
      %426 = vmatmul.mubr.f32.gmra.mrb[0].mxu0 %v292
      %v427 = vpop.f32.mrb[0].mxu0
      %v428 = vadd.f32 %v255, %v427
      %v429 = vpop.f32.mrb[0].mxu0
      %430 = vmatprep.mubr.f32.mxu0 0.0
      %431 = vmatmul.mubr.f32.gmra.mrb[0].mxu0 %v295
      %v432 = vpop.f32.mrb[0].mxu0
      %v433 = vadd.f32 %v255, %v432
      %v434 = vpop.f32.mrb[0].mxu0
      %435 = vmatprep.mubr.f32.mxu0 0.0
      %436 = vmatmul.mubr.f32.gmra.mrb[0].mxu0 %v298
      %v437 = vpop.f32.mrb[0].mxu0
      %v438 = vadd.f32 %v255, %v437
      %v439 = vpop.f32.mrb[0].mxu0
      %440 = vmatprep.mubr.f32.mxu0 0.0
      %441 = vmatmul.mubr.f32.gmra.mrb[0].mxu0 %v301
      %v442 = vpop.f32.mrb[0].mxu0
      %v443 = vadd.f32 %v255, %v442
      %v444 = vpop.f32.mrb[0].mxu0
      %445 = vmatprep.mubr.f32.mxu0 0.0
      %446 = vmatmul.mubr.f32.gmra.mrb[0].mxu0 %v304
      %v447 = vpop.f32.mrb[0].mxu0
      %v448 = vadd.f32 %v255, %v447
      %v449 = vpop.f32.mrb[0].mxu0
      %450 = vdwg.mxu0
      %v451 = vmax.f32 %v373, 0.0
      %v452 = vmax.f32 %v378, 0.0
      %v453 = vmax.f32 %v383, 0.0
      %v454 = vmax.f32 %v388, 0.0
      %v455 = vmax.f32 %v393, 0.0
      %v456 = vmax.f32 %v398, 0.0
      %v457 = vmax.f32 %v403, 0.0
      %v458 = vmax.f32 %v408, 0.0
      %v459 = vmax.f32 %v413, 0.0
      %v460 = vmax.f32 %v418, 0.0
      %v461 = vmax.f32 %v423, 0.0
      %v462 = vmax.f32 %v428, 0.0
      %v463 = vmax.f32 %v433, 0.0
      %v464 = vmax.f32 %v438, 0.0
      %v465 = vmax.f32 %v443, 0.0
      %v466 = vmax.f32 %v448, 0.0
      %v467 = vld [vmem:[%s3] sm:$0x1]
      %v469 = vlaneseq
      %v470 = vshrl.u32 %v469, 7
      %v471 = vsub.s32 0, %v470
      %v472 = vrot.slane %v467, %v471
      %v474 = vmul.f32 %v451, %v472
      %v475 = vmul.f32 %v452, %v472
      %v476 = vmul.f32 %v453, %v472
      %v477 = vmul.f32 %v454, %v472
      %v478 = vmul.f32 %v455, %v472
      %v479 = vmul.f32 %v456, %v472
      %v480 = vmul.f32 %v457, %v472
      %v481 = vmul.f32 %v458, %v472
      %v482 = vmul.f32 %v459, %v472
      %v483 = vmul.f32 %v460, %v472
      %v484 = vmul.f32 %v461, %v472
      %v485 = vmul.f32 %v462, %v472
      %v486 = vmul.f32 %v463, %v472
      %v487 = vmul.f32 %v464, %v472
      %v488 = vmul.f32 %v465, %v472
      %v489 = vmul.f32 %v466, %v472
      %490 = vadd.xlane.f32.xlu0 %v474
      %v491 = vpop.xlane.xlu0 %490
      %492 = vadd.xlane.f32.xlu0 %v475
      %v493 = vpop.xlane.xlu0 %492
      %494 = vadd.xlane.f32.xlu0 %v476
      %v495 = vpop.xlane.xlu0 %494
      %496 = vadd.xlane.f32.xlu0 %v477
      %v497 = vpop.xlane.xlu0 %496
      %498 = vadd.xlane.f32.xlu0 %v478
      %v499 = vpop.xlane.xlu0 %498
      %500 = vadd.xlane.f32.xlu0 %v479
      %v501 = vpop.xlane.xlu0 %500
      %502 = vadd.xlane.f32.xlu0 %v480
      %v503 = vpop.xlane.xlu0 %502
      %504 = vadd.xlane.f32.xlu0 %v481
      %v505 = vpop.xlane.xlu0 %504
      %506 = vadd.xlane.f32.xlu0 %v482
      %v507 = vpop.xlane.xlu0 %506
      %508 = vadd.xlane.f32.xlu0 %v483
      %v509 = vpop.xlane.xlu0 %508
      %510 = vadd.xlane.f32.xlu0 %v484
      %v511 = vpop.xlane.xlu0 %510
      %512 = vadd.xlane.f32.xlu0 %v485
      %v513 = vpop.xlane.xlu0 %512
      %514 = vadd.xlane.f32.xlu0 %v486
      %v515 = vpop.xlane.xlu0 %514
      %516 = vadd.xlane.f32.xlu0 %v487
      %v517 = vpop.xlane.xlu0 %516
      %518 = vadd.xlane.f32.xlu0 %v488
      %v519 = vpop.xlane.xlu0 %518
      %520 = vadd.xlane.f32.xlu0 %v489
      %v521 = vpop.xlane.xlu0 %520
      %v522 = vld [vmem:[#allocation2] sm:$0x1]
      %v524 = vlaneseq
      %v525 = vshrl.u32 %v524, 7
      %v526 = vsub.s32 0, %v525
      %v527 = vrot.slane %v522, %v526
      %v529 = vadd.f32 %v491, %v527
      %v530 = vadd.f32 %v493, %v527
      %v531 = vadd.f32 %v495, %v527
      %v532 = vadd.f32 %v497, %v527
      %v533 = vadd.f32 %v499, %v527
      %v534 = vadd.f32 %v501, %v527
      %v535 = vadd.f32 %v503, %v527
      %v536 = vadd.f32 %v505, %v527
      %v537 = vadd.f32 %v507, %v527
      %v538 = vadd.f32 %v509, %v527
      %v539 = vadd.f32 %v511, %v527
      %v540 = vadd.f32 %v513, %v527
      %v541 = vadd.f32 %v515, %v527
      %v542 = vadd.f32 %v517, %v527
      %v543 = vadd.f32 %v519, %v527
      %v544 = vadd.f32 %v521, %v527
      %vm545 = vcmask 7168
      %546 = vst.msk [vmem:[%s228] sm:$0xff] %vm545, %v529
      %547 = vst.msk [vmem:[%s228 + $0x8] sm:$0xff] %vm545, %v530
      %548 = vst.msk [vmem:[%s228 + $0x10] sm:$0xff] %vm545, %v531
      %549 = vst.msk [vmem:[%s228 + $0x18] sm:$0xff] %vm545, %v532
      %550 = vst.msk [vmem:[%s228 + $0x20] sm:$0xff] %vm545, %v533
      %551 = vst.msk [vmem:[%s228 + $0x28] sm:$0xff] %vm545, %v534
      %552 = vst.msk [vmem:[%s228 + $0x30] sm:$0xff] %vm545, %v535
      %553 = vst.msk [vmem:[%s228 + $0x38] sm:$0xff] %vm545, %v536
      %554 = vst.msk [vmem:[%s228 + $0x40] sm:$0xff] %vm545, %v537
      %555 = vst.msk [vmem:[%s228 + $0x48] sm:$0xff] %vm545, %v538
      %556 = vst.msk [vmem:[%s228 + $0x50] sm:$0xff] %vm545, %v539
      %557 = vst.msk [vmem:[%s228 + $0x58] sm:$0xff] %vm545, %v540
      %558 = vst.msk [vmem:[%s228 + $0x60] sm:$0xff] %vm545, %v541
      %559 = vst.msk [vmem:[%s228 + $0x68] sm:$0xff] %vm545, %v542
      %560 = vst.msk [vmem:[%s228 + $0x70] sm:$0xff] %vm545, %v543
      %561 = vst.msk [vmem:[%s228 + $0x78] sm:$0xff] %vm545, %v544
      %s562 = smul.u32 16, %s18
      %p563 = scmp.lt.s32.totalorder %s562, 31
      %s564 = scalar_select %p563, %s562, 31
      %s565 = smul.addr %s564, 8
      %s566 = scalar_lea.vmem %s5, %s565
      // Predicated region
      $region41: #{tpu_custom_call.1} parent=39 // pred_check
        %p567 = pneg %p146
      $region42: #{tpu_custom_call.1} parent=39 // pred_check_branch
        %569 = sbr.rel (%p567) target = $region44
      $region43: #{tpu_custom_call.1} parent=39 // pred_region
        %s570 = smul.u32 16, %s18
      $region44: #{tpu_custom_call.1} parent=39 // pred_fallthru
        _
    $region40: #{tpu_custom_call.1} parent=5 // pred_fallthru
      _
    %p571 = scmp.le.s32.totalorder 2, %s13
    // Predicated region
    $region45: #{tpu_custom_call.1} parent=5 // pred_check
      %p572 = pneg %p571
    $region46: #{tpu_custom_call.1} parent=5 // pred_check_branch
      %574 = sbr.rel (%p572) target = $region48
    $region47: #{tpu_custom_call.1} parent=5 // pred_region
      %s575 = ssub.s32 %s13, 2
      // Predicated region
      $region49: #{tpu_custom_call.1} parent=47 // pred_check
        %p576 = pneg %p152
      $region50: #{tpu_custom_call.1} parent=47 // pred_check_branch
        %578 = sbr.rel (%p576) target = $region52
      $region51: #{tpu_custom_call.1} parent=47 // pred_region
        %s579 = smul.u32 16, %s19
        %p580 = scmp.lt.s32.totalorder %s579, 31
        %s581 = scalar_select %p580, %s579, 31
        %s582 = smul.addr %s581, 8
        %s583 = scalar_lea.vmem %s5, %s582
      $region52: #{tpu_custom_call.1} parent=47 // pred_fallthru
        _
    $region48: #{tpu_custom_call.1} parent=5 // pred_fallthru
      _
  $region6: #{tpu_custom_call.1} parent=0 // loop_footer
    %s17 = sadd.s32 1, %s13
  $region7: #{tpu_custom_call.1} parent=0 // loop_footer_branch
    %12 = sbr.rel target = $region3
  $region8: #{tpu_custom_call.1} parent=0 // loop_exit
    _

</llo_original>
